<compile_context>
chip_gen: v6e
topology: v6e:2x2x1
jax: 0.10.0
libtpu: 0.0.40
codegen_flags: <defaults>
</compile_context>

<pallas_src>
import jax
import jax.numpy as jnp
import numpy as np
from jax import lax
from jax.experimental import pallas as pl
from jax.experimental.pallas import tpu as pltpu

KSIZE = 7
PAD = 3  # padding = 3 for kernel_size = 7 (PyTorch module default)


def spatial_attention_kernel(bn_ref, x_ref, kmat_ref, out_ref):
    # bn_ref   : SMEM (3,)          [gamma, beta, eps]
    # x_ref    : VMEM (N, C, HW)    input, lane-dense spatial layout
    # kmat_ref : VMEM (2, HW, HW)   unrolled conv matrices (avg-, max-channel)
    # out_ref  : VMEM (N, C, HW)
    x = x_ref[...]                                    # (N, C, HW) f32

    # channel-wise mean / max (torch.mean / torch.max over dim=1)
    avg = jnp.mean(x, axis=1)                         # (N, HW)
    mx = jnp.max(x, axis=1)                           # (N, HW)

    # Conv2d(2 -> 1, 7x7, padding=3, bias=False) as two MXU matmuls against
    # the unrolled-conv weight matrices (zero padding is folded into them).
    conv = (jnp.dot(avg, kmat_ref[0], preferred_element_type=jnp.float32)
            + jnp.dot(mx, kmat_ref[1], preferred_element_type=jnp.float32))

    # BatchNorm2d(1), training mode: batch statistics, biased variance.
    # TODO(synk): running-stat buffer updates (training side effect) not modeled.
    gamma = bn_ref[0]
    beta = bn_ref[1]
    eps = bn_ref[2]
    mean = jnp.mean(conv)
    var = jnp.mean((conv - mean) ** 2)
    norm = (conv - mean) * lax.rsqrt(var + eps) * gamma + beta

    sig = jax.nn.sigmoid(norm)                        # (N, HW)
    out_ref[...] = x * sig[:, None, :]                # broadcast over channels


def _unrolled_conv_matrices(conv_w, H, W):
    """Unroll Conv2d(2->1, 7x7, pad=3) weights into two (H*W, H*W) matrices.

    K[c, yi*W + xi, yo*W + xo] = w[c, yi - yo + PAD, xi - xo + PAD]
    when both offsets lie in [0, KSIZE), else 0 (zero padding folded in).
    """
    w = conv_w.reshape(2, KSIZE, KSIZE).astype(jnp.float32)
    yi = jnp.arange(H)
    xi = jnp.arange(W)
    dy = yi[:, None] - yi[None, :] + PAD              # (H_in, H_out)
    dx = xi[:, None] - xi[None, :] + PAD              # (W_in, W_out)
    vy = (dy >= 0) & (dy < KSIZE)
    vx = (dx >= 0) & (dx < KSIZE)
    dyc = jnp.clip(dy, 0, KSIZE - 1)
    dxc = jnp.clip(dx, 0, KSIZE - 1)
    taps = w[:, dyc[:, None, :, None], dxc[None, :, None, :]]    # (2,H,W,H,W)
    mask = (vy[:, None, :, None] & vx[None, :, None, :]).astype(jnp.float32)
    return (taps * mask[None]).reshape(2, H * W, H * W)


def spatial_attention(x, conv_w, gamma, beta, eps=1e-5):
    """x: (N, C, H, W) f32, conv_w: (1, 2, 7, 7) f32."""
    N, C, H, W = x.shape
    HW = H * W
    kmat = _unrolled_conv_matrices(conv_w, H, W)                 # (2, HW, HW)
    bn = jnp.array([gamma, beta, eps], dtype=jnp.float32)        # (3,)
    x_flat = x.reshape(N, C, HW).astype(jnp.float32)             # lane-dense

    out_flat = pl.pallas_call(
        spatial_attention_kernel,
        out_shape=jax.ShapeDtypeStruct((N, C, HW), jnp.float32),
        in_specs=[
            pl.BlockSpec(memory_space=pltpu.MemorySpace.SMEM),   # bn params
            pl.BlockSpec(memory_space=pltpu.MemorySpace.VMEM),   # x
            pl.BlockSpec(memory_space=pltpu.MemorySpace.VMEM),   # conv matrices
        ],
        out_specs=pl.BlockSpec(memory_space=pltpu.MemorySpace.VMEM),
    )(bn, x_flat, kmat)
    return out_flat.reshape(N, C, H, W)


def spatial_attention_ref(x, conv_w, gamma, beta, eps=1e-5):
    """Pure-JAX reference mirroring the PyTorch forward."""
    avg = jnp.mean(x, axis=1, keepdims=True)
    mx = jnp.max(x, axis=1, keepdims=True)
    cat = jnp.concatenate([avg, mx], axis=1)
    out = lax.conv_general_dilated(
        cat, conv_w, window_strides=(1, 1),
        padding=((PAD, PAD), (PAD, PAD)),
        dimension_numbers=("NCHW", "OIHW", "NCHW"),
        precision=lax.Precision.HIGHEST)
    mean = jnp.mean(out)
    var = jnp.mean((out - mean) ** 2)
    norm = (out - mean) / jnp.sqrt(var + eps) * gamma + beta
    return x * jax.nn.sigmoid(norm)


if __name__ == "__main__":
    key = jax.random.PRNGKey(0)
    kx, kw = jax.random.split(key)

    N, C, H, W = 2, 4, 16, 16
    x = jax.random.normal(kx, (N, C, H, W), dtype=jnp.float32)

    # Conv2d(2, 1, 7, bias=False) weight: kaiming-uniform-like deterministic init.
    fan_in = 2 * KSIZE * KSIZE
    bound = 1.0 / np.sqrt(fan_in)
    conv_w = jax.random.uniform(kw, (1, 2, KSIZE, KSIZE),
                                minval=-bound, maxval=bound, dtype=jnp.float32)

    # BatchNorm2d(1) fresh init: gamma=1, beta=0, eps=1e-5.
    gamma, beta, eps = 1.0, 0.0, 1e-5

    out = jax.block_until_ready(spatial_attention(x, conv_w, gamma, beta, eps))
    ref = jax.block_until_ready(spatial_attention_ref(x, conv_w, gamma, beta, eps))

    np.testing.assert_allclose(np.asarray(out), np.asarray(ref),
                               rtol=2e-4, atol=2e-4)
    print("KERNEL_OK")
</pallas_src>

<mosaic_0001>
module attributes {stable_mosaic.version = 11 : i64} {
  func.func @spatial_attention_kernel(%arg0: memref<3xf32, #tpu.memory_space<smem>>, %arg1: memref<2x4x256xf32, #tpu.memory_space<vmem>>, %arg2: memref<2x256x256xf32, #tpu.memory_space<vmem>>, %arg3: memref<2x4x256xf32, #tpu.memory_space<vmem>>) attributes {dimension_semantics = [], scalar_prefetch = 0 : i64, scratch_operands = 0 : i64, tpu.core_type = #tpu.core_type<tc>} {
    %c0 = arith.constant 0 : index
    %c0_0 = arith.constant 0 : index
    %c0_1 = arith.constant 0 : index
    %0 = vector.load %arg1[%c0, %c0_0, %c0_1] : memref<2x4x256xf32, #tpu.memory_space<vmem>>, vector<2x4x256xf32>
    %cst = arith.constant dense<0.000000e+00> : vector<2x256xf32>
    %1 = vector.multi_reduction <add>, %0, %cst [1] : vector<2x4x256xf32> to vector<2x256xf32>
    %cst_2 = arith.constant 4.000000e+00 : f32
    %2 = vector.broadcast %cst_2 : f32 to vector<2x256xf32>
    %3 = arith.divf %1, %2 : vector<2x256xf32>
    %cst_3 = arith.constant dense<0xFF800000> : vector<2x256xf32>
    %4 = vector.multi_reduction <maximumf>, %0, %cst_3 [1] : vector<2x4x256xf32> to vector<2x256xf32>
    %c0_4 = arith.constant 0 : index
    %c0_5 = arith.constant 0 : index
    %c0_6 = arith.constant 0 : index
    %5 = vector.load %arg2[%c0_4, %c0_5, %c0_6] : memref<2x256x256xf32, #tpu.memory_space<vmem>>, vector<1x256x256xf32>
    %6 = vector.shape_cast %5 : vector<1x256x256xf32> to vector<256x256xf32>
    %cst_7 = arith.constant dense<0.000000e+00> : vector<2x256xf32>
    %7 = tpu.matmul %3, %6, %cst_7 {dimension_numbers = #tpu.dot_dimension_numbers<[1], [0], [0], [1], [0, 0, 1, 1], [], []>} : vector<2x256xf32>, vector<256x256xf32>, vector<2x256xf32> -> vector<2x256xf32>
    %c1 = arith.constant 1 : index
    %c0_8 = arith.constant 0 : index
    %c0_9 = arith.constant 0 : index
    %8 = vector.load %arg2[%c1, %c0_8, %c0_9] : memref<2x256x256xf32, #tpu.memory_space<vmem>>, vector<1x256x256xf32>
    %9 = vector.shape_cast %8 : vector<1x256x256xf32> to vector<256x256xf32>
    %cst_10 = arith.constant dense<0.000000e+00> : vector<2x256xf32>
    %10 = tpu.matmul %4, %9, %cst_10 {dimension_numbers = #tpu.dot_dimension_numbers<[1], [0], [0], [1], [0, 0, 1, 1], [], []>} : vector<2x256xf32>, vector<256x256xf32>, vector<2x256xf32> -> vector<2x256xf32>
    %11 = arith.addf %7, %10 : vector<2x256xf32>
    %c0_11 = arith.constant 0 : index
    %12 = memref.load %arg0[%c0_11] : memref<3xf32, #tpu.memory_space<smem>>
    %c1_12 = arith.constant 1 : index
    %13 = memref.load %arg0[%c1_12] : memref<3xf32, #tpu.memory_space<smem>>
    %c2 = arith.constant 2 : index
    %14 = memref.load %arg0[%c2] : memref<3xf32, #tpu.memory_space<smem>>
    %15 = vector.shape_cast %11 : vector<2x256xf32> to vector<1x2x256xf32>
    %cst_13 = arith.constant dense<0.000000e+00> : vector<1xf32>
    %16 = vector.multi_reduction <add>, %15, %cst_13 [1, 2] : vector<1x2x256xf32> to vector<1xf32>
    %17 = vector.shape_cast %16 : vector<1xf32> to vector<1x1x1xf32>
    %18 = vector.extract %17[0, 0, 0] : f32 from vector<1x1x1xf32>
    %cst_14 = arith.constant 5.120000e+02 : f32
    %19 = arith.divf %18, %cst_14 : f32
    %20 = vector.broadcast %19 : f32 to vector<2x256xf32>
    %21 = arith.subf %11, %20 : vector<2x256xf32>
    %22 = arith.mulf %21, %21 : vector<2x256xf32>
    %23 = vector.shape_cast %22 : vector<2x256xf32> to vector<1x2x256xf32>
    %cst_15 = arith.constant dense<0.000000e+00> : vector<1xf32>
    %24 = vector.multi_reduction <add>, %23, %cst_15 [1, 2] : vector<1x2x256xf32> to vector<1xf32>
    %25 = vector.shape_cast %24 : vector<1xf32> to vector<1x1x1xf32>
    %26 = vector.extract %25[0, 0, 0] : f32 from vector<1x1x1xf32>
    %cst_16 = arith.constant 5.120000e+02 : f32
    %27 = arith.divf %26, %cst_16 : f32
    %28 = vector.broadcast %19 : f32 to vector<2x256xf32>
    %29 = arith.subf %11, %28 : vector<2x256xf32>
    %30 = arith.addf %27, %14 : f32
    %31 = math.rsqrt %30 : f32
    %32 = vector.broadcast %31 : f32 to vector<2x256xf32>
    %33 = arith.mulf %29, %32 : vector<2x256xf32>
    %34 = vector.broadcast %12 : f32 to vector<2x256xf32>
    %35 = arith.mulf %33, %34 : vector<2x256xf32>
    %36 = vector.broadcast %13 : f32 to vector<2x256xf32>
    %37 = arith.addf %35, %36 : vector<2x256xf32>
    %38 = arith.negf %37 : vector<2x256xf32>
    %39 = math.exp %38 : vector<2x256xf32>
    %cst_17 = arith.constant 1.000000e+00 : f32
    %40 = vector.broadcast %cst_17 : f32 to vector<2x256xf32>
    %41 = arith.addf %40, %39 : vector<2x256xf32>
    %42 = arith.divf %40, %41 : vector<2x256xf32>
    %43 = vector.shape_cast %42 : vector<2x256xf32> to vector<2x1x256xf32>
    %44 = vector.broadcast %43 : vector<2x1x256xf32> to vector<2x4x256xf32>
    %45 = arith.mulf %0, %44 : vector<2x4x256xf32>
    %c0_18 = arith.constant 0 : index
    %c0_19 = arith.constant 0 : index
    %c0_20 = arith.constant 0 : index
    %46 = vector.load %arg3[%c0_18, %c0_19, %c0_20] : memref<2x4x256xf32, #tpu.memory_space<vmem>>, vector<2x4x256xf32>
    tpu.vector_store %arg3[%c0_18, %c0_19, %c0_20], %45 {strides = array<i32>} : memref<2x4x256xf32, #tpu.memory_space<vmem>>, vector<2x4x256xf32>,
    return
  }
}

</mosaic_0001>

<llo_original>
// kernel: tpu_custom_call.1
$region0: #{tpu_custom_call.1}
  #allocation0 [shape = 'u32[]', space=smem, size = 0x4, offset = 0x4, fixed_abs, tag = 'smem constant byte address 0x4 - core index']
  #allocation1 [shape = 'u32[144,128]{1,0:T(1,128)}', space=vmem, size = 0x12000, scoped, tag = 'internal scratch']
  %s0 = inlined_call_operand.hbm [shape: f32[3], index: 0, kind: input, shape index: {}]
  %s1 = inlined_call_operand.hbm [shape: f32[2,4,256], index: 1, kind: input, shape index: {}]
  %s2 = inlined_call_operand.hbm [shape: f32[2,256,256], index: 2, kind: input, shape index: {}]
  %s3 = inlined_call_operand.hbm [shape: f32[2,4,256], index: 3, kind: output, shape index: {}]
  %s4 = sld [smem:[#allocation0]]
  $region34: #{tpu_custom_call.1} parent=0
    _
  %s6 = ssub.s32 1, %s4
  %s7 = scalar_select 0, %s6, %s4
  $region1: #{tpu_custom_call.1} parent=0
    #allocation2 [shape = 'u8[512]{0}', space=smem, size = 0x200, scoped, tag = 'input window, operand 0, single buffered']
    #allocation3 [shape = 's32[1]{0}', space=sflag, size = 0x4, scoped, tag = 'scoped memory for tpu_custom_call.1']
    #allocation4 [shape = 's32[1]{0}', space=sflag, size = 0x4, scoped, tag = 'scoped memory for tpu_custom_call.1']
    #allocation5 [shape = 's32[1]{0}', space=sflag, size = 0x4, scoped, tag = 'scoped memory for tpu_custom_call.1']
    #allocation6 [shape = 'u8[8192]{0}', space=vmem, size = 0x2000, scoped, tag = 'input window, operand 1, single buffered']
    #allocation7 [shape = 'u8[524288]{0}', space=vmem, size = 0x80000, scoped, tag = 'input window, operand 2, single buffered']
    #allocation8 [shape = 's32[1]{0}', space=sflag, size = 0x4, scoped, tag = 'scoped memory for tpu_custom_call.1']
    #allocation9 [shape = 'u8[8192]{0}', space=vmem, size = 0x2000, scoped, tag = 'output window, operand 0, single buffered']
    %8 = vsyncpa [#allocation5], 0
    %9 = vsyncpa [#allocation3], 0
    %10 = vsyncpa [#allocation8], 0
    %11 = vsyncpa [#allocation4], 0
    // Predicated region
    $region2: #{tpu_custom_call.1} parent=1 // pred_check
      _
    $region3: #{tpu_custom_call.1} parent=1 // pred_check_branch
      %13 = sbr.rel (0) target = $region5
    $region4: #{tpu_custom_call.1} parent=1 // pred_region
      %s15 = ssub.s32 16, 16
      %16 = vsyncadd [#allocation5], %s15
      %19 = dma.hbm_to_smem %s0, 16, [#allocation2], [#allocation5]
    $region5: #{tpu_custom_call.1} parent=1 // pred_fallthru
      _
    // Predicated region
    $region6: #{tpu_custom_call.1} parent=1 // pred_check
      _
    $region7: #{tpu_custom_call.1} parent=1 // pred_check_branch
      %21 = sbr.rel (0) target = $region9
    $region8: #{tpu_custom_call.1} parent=1 // pred_region
      %s23 = ssub.s32 256, 256
      %24 = vsyncadd [#allocation3], %s23
      %s25 = sshll.u32 [#allocation6], 4
      %s26 = int_to_ptr.vmem [resolvable:$true] %s25
      %31 = dma.hbm_to_vmem [thread:$0]  %s1, 256, %s26, [#allocation3], 128, 128, 8
    $region9: #{tpu_custom_call.1} parent=1 // pred_fallthru
      _
    // Predicated region
    $region10: #{tpu_custom_call.1} parent=1 // pred_check
      _
    $region11: #{tpu_custom_call.1} parent=1 // pred_check_branch
      %33 = sbr.rel (0) target = $region13
    $region12: #{tpu_custom_call.1} parent=1 // pred_region
      %s35 = ssub.s32 16384, 16384
      %36 = vsyncadd [#allocation8], %s35
      %s37 = sshll.u32 [#allocation7], 4
      %s38 = int_to_ptr.vmem [resolvable:$true] %s37
      %43 = dma.hbm_to_vmem [thread:$0]  %s2, 16384, %s38, [#allocation8], 256, 256, 16
    $region13: #{tpu_custom_call.1} parent=1 // pred_fallthru
      _
    // Predicated region
    $region14: #{tpu_custom_call.1} parent=1 // pred_check
      _
    $region15: #{tpu_custom_call.1} parent=1 // pred_check_branch
      %45 = sbr.rel (0) target = $region17
    $region16: #{tpu_custom_call.1} parent=1 // pred_region
      %46 = dma.done [#allocation5], 16
    $region17: #{tpu_custom_call.1} parent=1 // pred_fallthru
      _
    // Predicated region
    $region18: #{tpu_custom_call.1} parent=1 // pred_check
      _
    $region19: #{tpu_custom_call.1} parent=1 // pred_check_branch
      %48 = sbr.rel (0) target = $region21
    $region20: #{tpu_custom_call.1} parent=1 // pred_region
      %49 = dma.done [#allocation3], 256
    $region21: #{tpu_custom_call.1} parent=1 // pred_fallthru
      _
    // Predicated region
    $region22: #{tpu_custom_call.1} parent=1 // pred_check
      _
    $region23: #{tpu_custom_call.1} parent=1 // pred_check_branch
      %51 = sbr.rel (0) target = $region25
    $region24: #{tpu_custom_call.1} parent=1 // pred_region
      %52 = dma.done [#allocation8], 16384
    $region25: #{tpu_custom_call.1} parent=1 // pred_fallthru
      _
    %53 = sfence
    %v54 = vld [vmem:[#allocation6] sm:$0xff]
    %v55 = vld [vmem:[#allocation6 + $0x8] sm:$0xff]
    %v58 = vcombine.high %v54, %v54
    %v59 = vcombine.high %v55, %v55
    %vm62 = vcmask 1043456
    %v63 = vsel %vm62, %v54, 0.0
    %v64 = vrot.slane %v63, 4
    %v65 = vadd.f32 %v63, %v64
    %v66 = vrot.slane %v65, 2
    %v67 = vadd.f32 %v65, %v66
    %v68 = vrot.slane %v67, 1
    %v69 = vadd.f32 %v67, %v68
    %v70 = vsel %vm62, %v58, 0.0
    %v71 = vrot.slane %v70, 4
    %v72 = vadd.f32 %v70, %v71
    %v73 = vrot.slane %v72, 2
    %v74 = vadd.f32 %v72, %v73
    %v75 = vrot.slane %v74, 1
    %v76 = vadd.f32 %v74, %v75
    %v77 = vsel %vm62, %v55, 0.0
    %v78 = vrot.slane %v77, 4
    %v79 = vadd.f32 %v77, %v78
    %v80 = vrot.slane %v79, 2
    %v81 = vadd.f32 %v79, %v80
    %v82 = vrot.slane %v81, 1
    %v83 = vadd.f32 %v81, %v82
    %v84 = vsel %vm62, %v59, 0.0
    %v85 = vrot.slane %v84, 4
    %v86 = vadd.f32 %v84, %v85
    %v87 = vrot.slane %v86, 2
    %v88 = vadd.f32 %v86, %v87
    %v89 = vrot.slane %v88, 1
    %v90 = vadd.f32 %v88, %v89
    %v91 = vrcp.pop 4.0
    %v92 = vmul.f32 %v69, %v91
    %v93 = vmul.f32 %v76, %v91
    %v94 = vmul.f32 %v83, %v91
    %v95 = vmul.f32 %v90, %v91
    %v96 = vsel %vm62, %v54, -inf
    %v97 = vrot.slane %v96, 4
    %v98 = vmax.f32 %v96, %v97
    %v99 = vrot.slane %v98, 2
    %v100 = vmax.f32 %v98, %v99
    %v101 = vrot.slane %v100, 1
    %v102 = vmax.f32 %v100, %v101
    %v103 = vsel %vm62, %v58, -inf
    %v104 = vrot.slane %v103, 4
    %v105 = vmax.f32 %v103, %v104
    %v106 = vrot.slane %v105, 2
    %v107 = vmax.f32 %v105, %v106
    %v108 = vrot.slane %v107, 1
    %v109 = vmax.f32 %v107, %v108
    %v110 = vsel %vm62, %v55, -inf
    %v111 = vrot.slane %v110, 4
    %v112 = vmax.f32 %v110, %v111
    %v113 = vrot.slane %v112, 2
    %v114 = vmax.f32 %v112, %v113
    %v115 = vrot.slane %v114, 1
    %v116 = vmax.f32 %v114, %v115
    %v117 = vsel %vm62, %v59, -inf
    %v118 = vrot.slane %v117, 4
    %v119 = vmax.f32 %v117, %v118
    %v120 = vrot.slane %v119, 2
    %v121 = vmax.f32 %v119, %v120
    %v122 = vrot.slane %v121, 1
    %v123 = vmax.f32 %v121, %v122
    %v124 = vld [vmem:[#allocation7] sm:$0xff]
    %v125 = vld [vmem:[#allocation7 + $0x8] sm:$0xff]
    %v126 = vld [vmem:[#allocation7 + $0x10] sm:$0xff]
    %v127 = vld [vmem:[#allocation7 + $0x18] sm:$0xff]
    %v128 = vld [vmem:[#allocation7 + $0x20] sm:$0xff]
    %v129 = vld [vmem:[#allocation7 + $0x28] sm:$0xff]
    %v130 = vld [vmem:[#allocation7 + $0x30] sm:$0xff]
    %v131 = vld [vmem:[#allocation7 + $0x38] sm:$0xff]
    %v132 = vld [vmem:[#allocation7 + $0x40] sm:$0xff]
    %v133 = vld [vmem:[#allocation7 + $0x48] sm:$0xff]
    %v134 = vld [vmem:[#allocation7 + $0x50] sm:$0xff]
    %v135 = vld [vmem:[#allocation7 + $0x58] sm:$0xff]
    %v136 = vld [vmem:[#allocation7 + $0x60] sm:$0xff]
    %v137 = vld [vmem:[#allocation7 + $0x68] sm:$0xff]
    %v138 = vld [vmem:[#allocation7 + $0x70] sm:$0xff]
    %v139 = vld [vmem:[#allocation7 + $0x78] sm:$0xff]
    %v140 = vld [vmem:[#allocation7 + $0x80] sm:$0xff]
    %v141 = vld [vmem:[#allocation7 + $0x88] sm:$0xff]
    %v142 = vld [vmem:[#allocation7 + $0x90] sm:$0xff]
    %v143 = vld [vmem:[#allocation7 + $0x98] sm:$0xff]
    %v144 = vld [vmem:[#allocation7 + $0xa0] sm:$0xff]
    %v145 = vld [vmem:[#allocation7 + $0xa8] sm:$0xff]
    %v146 = vld [vmem:[#allocation7 + $0xb0] sm:$0xff]
    %v147 = vld [vmem:[#allocation7 + $0xb8] sm:$0xff]
    %v148 = vld [vmem:[#allocation7 + $0xc0] sm:$0xff]
    %v149 = vld [vmem:[#allocation7 + $0xc8] sm:$0xff]
    %v150 = vld [vmem:[#allocation7 + $0xd0] sm:$0xff]
    %v151 = vld [vmem:[#allocation7 + $0xd8] sm:$0xff]
    %v152 = vld [vmem:[#allocation7 + $0xe0] sm:$0xff]
    %v153 = vld [vmem:[#allocation7 + $0xe8] sm:$0xff]
    %v154 = vld [vmem:[#allocation7 + $0xf0] sm:$0xff]
    %v155 = vld [vmem:[#allocation7 + $0xf8] sm:$0xff]
    %v156 = vld [vmem:[#allocation7 + $0x100] sm:$0xff]
    %v157 = vld [vmem:[#allocation7 + $0x108] sm:$0xff]
    %v158 = vld [vmem:[#allocation7 + $0x110] sm:$0xff]
    %v159 = vld [vmem:[#allocation7 + $0x118] sm:$0xff]
    %v160 = vld [vmem:[#allocation7 + $0x120] sm:$0xff]
    %v161 = vld [vmem:[#allocation7 + $0x128] sm:$0xff]
    %v162 = vld [vmem:[#allocation7 + $0x130] sm:$0xff]
    %v163 = vld [vmem:[#allocation7 + $0x138] sm:$0xff]
    %v164 = vld [vmem:[#allocation7 + $0x140] sm:$0xff]
    %v165 = vld [vmem:[#allocation7 + $0x148] sm:$0xff]
    %v166 = vld [vmem:[#allocation7 + $0x150] sm:$0xff]
    %v167 = vld [vmem:[#allocation7 + $0x158] sm:$0xff]
    %v168 = vld [vmem:[#allocation7 + $0x160] sm:$0xff]
    %v169 = vld [vmem:[#allocation7 + $0x168] sm:$0xff]
    %v170 = vld [vmem:[#allocation7 + $0x170] sm:$0xff]
    %v171 = vld [vmem:[#allocation7 + $0x178] sm:$0xff]
    %v172 = vld [vmem:[#allocation7 + $0x180] sm:$0xff]
    %v173 = vld [vmem:[#allocation7 + $0x188] sm:$0xff]
    %v174 = vld [vmem:[#allocation7 + $0x190] sm:$0xff]
    %v175 = vld [vmem:[#allocation7 + $0x198] sm:$0xff]
    %v176 = vld [vmem:[#allocation7 + $0x1a0] sm:$0xff]
    %v177 = vld [vmem:[#allocation7 + $0x1a8] sm:$0xff]
    %v178 = vld [vmem:[#allocation7 + $0x1b0] sm:$0xff]
    %v179 = vld [vmem:[#allocation7 + $0x1b8] sm:$0xff]
    %v180 = vld [vmem:[#allocation7 + $0x1c0] sm:$0xff]
    %v181 = vld [vmem:[#allocation7 + $0x1c8] sm:$0xff]
    %v182 = vld [vmem:[#allocation7 + $0x1d0] sm:$0xff]
    %v183 = vld [vmem:[#allocation7 + $0x1d8] sm:$0xff]
    %v184 = vld [vmem:[#allocation7 + $0x1e0] sm:$0xff]
    %v185 = vld [vmem:[#allocation7 + $0x1e8] sm:$0xff]
    %v186 = vld [vmem:[#allocation7 + $0x1f0] sm:$0xff]
    %v187 = vld [vmem:[#allocation7 + $0x1f8] sm:$0xff]
    %s188 = scalar_lea.vmem [#allocation7], 512
    %v189 = vld [vmem:[%s188] sm:$0xff]
    %v190 = vld [vmem:[%s188 + $0x8] sm:$0xff]
    %v191 = vld [vmem:[%s188 + $0x10] sm:$0xff]
    %v192 = vld [vmem:[%s188 + $0x18] sm:$0xff]
    %v193 = vld [vmem:[%s188 + $0x20] sm:$0xff]
    %v194 = vld [vmem:[%s188 + $0x28] sm:$0xff]
    %v195 = vld [vmem:[%s188 + $0x30] sm:$0xff]
    %v196 = vld [vmem:[%s188 + $0x38] sm:$0xff]
    %v197 = vld [vmem:[%s188 + $0x40] sm:$0xff]
    %v198 = vld [vmem:[%s188 + $0x48] sm:$0xff]
    %v199 = vld [vmem:[%s188 + $0x50] sm:$0xff]
    %v200 = vld [vmem:[%s188 + $0x58] sm:$0xff]
    %v201 = vld [vmem:[%s188 + $0x60] sm:$0xff]
    %v202 = vld [vmem:[%s188 + $0x68] sm:$0xff]
    %v203 = vld [vmem:[%s188 + $0x70] sm:$0xff]
    %v204 = vld [vmem:[%s188 + $0x78] sm:$0xff]
    %v205 = vld [vmem:[%s188 + $0x80] sm:$0xff]
    %v206 = vld [vmem:[%s188 + $0x88] sm:$0xff]
    %v207 = vld [vmem:[%s188 + $0x90] sm:$0xff]
    %v208 = vld [vmem:[%s188 + $0x98] sm:$0xff]
    %v209 = vld [vmem:[%s188 + $0xa0] sm:$0xff]
    %v210 = vld [vmem:[%s188 + $0xa8] sm:$0xff]
    %v211 = vld [vmem:[%s188 + $0xb0] sm:$0xff]
    %v212 = vld [vmem:[%s188 + $0xb8] sm:$0xff]
    %v213 = vld [vmem:[%s188 + $0xc0] sm:$0xff]
    %v214 = vld [vmem:[%s188 + $0xc8] sm:$0xff]
    %v215 = vld [vmem:[%s188 + $0xd0] sm:$0xff]
    %v216 = vld [vmem:[%s188 + $0xd8] sm:$0xff]
    %v217 = vld [vmem:[%s188 + $0xe0] sm:$0xff]
    %v218 = vld [vmem:[%s188 + $0xe8] sm:$0xff]
    %v219 = vld [vmem:[%s188 + $0xf0] sm:$0xff]
    %v220 = vld [vmem:[%s188 + $0xf8] sm:$0xff]
    %v221 = vld [vmem:[%s188 + $0x100] sm:$0xff]
    %v222 = vld [vmem:[%s188 + $0x108] sm:$0xff]
    %v223 = vld [vmem:[%s188 + $0x110] sm:$0xff]
    %v224 = vld [vmem:[%s188 + $0x118] sm:$0xff]
    %v225 = vld [vmem:[%s188 + $0x120] sm:$0xff]
    %v226 = vld [vmem:[%s188 + $0x128] sm:$0xff]
    %v227 = vld [vmem:[%s188 + $0x130] sm:$0xff]
    %v228 = vld [vmem:[%s188 + $0x138] sm:$0xff]
    %v229 = vld [vmem:[%s188 + $0x140] sm:$0xff]
    %v230 = vld [vmem:[%s188 + $0x148] sm:$0xff]
    %v231 = vld [vmem:[%s188 + $0x150] sm:$0xff]
    %v232 = vld [vmem:[%s188 + $0x158] sm:$0xff]
    %v233 = vld [vmem:[%s188 + $0x160] sm:$0xff]
    %v234 = vld [vmem:[%s188 + $0x168] sm:$0xff]
    %v235 = vld [vmem:[%s188 + $0x170] sm:$0xff]
    %v236 = vld [vmem:[%s188 + $0x178] sm:$0xff]
    %v237 = vld [vmem:[%s188 + $0x180] sm:$0xff]
    %v238 = vld [vmem:[%s188 + $0x188] sm:$0xff]
    %v239 = vld [vmem:[%s188 + $0x190] sm:$0xff]
    %v240 = vld [vmem:[%s188 + $0x198] sm:$0xff]
    %v241 = vld [vmem:[%s188 + $0x1a0] sm:$0xff]
    %v242 = vld [vmem:[%s188 + $0x1a8] sm:$0xff]
    %v243 = vld [vmem:[%s188 + $0x1b0] sm:$0xff]
    %v244 = vld [vmem:[%s188 + $0x1b8] sm:$0xff]
    %v245 = vld [vmem:[%s188 + $0x1c0] sm:$0xff]
    %v246 = vld [vmem:[%s188 + $0x1c8] sm:$0xff]
    %v247 = vld [vmem:[%s188 + $0x1d0] sm:$0xff]
    %v248 = vld [vmem:[%s188 + $0x1d8] sm:$0xff]
    %v249 = vld [vmem:[%s188 + $0x1e0] sm:$0xff]
    %v250 = vld [vmem:[%s188 + $0x1e8] sm:$0xff]
    %v251 = vld [vmem:[%s188 + $0x1f0] sm:$0xff]
    %v252 = vld [vmem:[%s188 + $0x1f8] sm:$0xff]
    %vm257 = vcmask 1041409
    %v258 = vsel %vm257, %v116, %v102
    %v259 = vsel %vm257, %v123, %v109
    %262 = vmatprep.subr.mxu0 %v220
    %263 = vmatpush1.msra.mxu0 %v219
    %264 = vmatprep.subr.mxu0 %v218
    %265 = vmatpush1.msra.mxu0 %v217
    %266 = vmatprep.subr.mxu0 %v216
    %267 = vmatpush1.msra.mxu0 %v215
    %268 = vmatprep.subr.mxu0 %v214
    %269 = vmatpush1.msra.mxu0 %v213
    %270 = vmatprep.subr.mxu0 %v212
    %271 = vmatpush1.msra.mxu0 %v211
    %272 = vmatprep.subr.mxu0 %v210
    %273 = vmatpush1.msra.mxu0 %v209
    %274 = vmatprep.subr.mxu0 %v208
    %275 = vmatpush1.msra.mxu0 %v207
    %276 = vmatprep.subr.mxu0 %v206
    %277 = vmatpush1.msra.mxu0 %v205
    %278 = vmatprep.subr.mxu0 %v204
    %279 = vmatpush1.msra.mxu0 %v203
    %280 = vmatprep.subr.mxu0 %v202
    %281 = vmatpush1.msra.mxu0 %v201
    %282 = vmatprep.subr.mxu0 %v200
    %283 = vmatpush1.msra.mxu0 %v199
    %284 = vmatprep.subr.mxu0 %v198
    %285 = vmatpush1.msra.mxu0 %v197
    %286 = vmatprep.subr.mxu0 %v196
    %287 = vmatpush1.msra.mxu0 %v195
    %288 = vmatprep.subr.mxu0 %v194
    %289 = vmatpush1.msra.mxu0 %v193
    %290 = vmatprep.subr.mxu0 %v192
    %291 = vmatpush1.msra.mxu0 %v191
    %292 = vmatprep.subr.mxu0 %v190
    %293 = vmatpush1.msra.mxu0 %v189
    %294 = vmatprep.subr.mxu0 %v252
    %295 = vmatpush2.msra.mxu0 %v251
    %296 = vmatprep.subr.mxu0 %v250
    %297 = vmatpush2.msra.mxu0 %v249
    %298 = vmatprep.subr.mxu0 %v248
    %299 = vmatpush2.msra.mxu0 %v247
    %300 = vmatprep.subr.mxu0 %v246
    %301 = vmatpush2.msra.mxu0 %v245
    %302 = vmatprep.subr.mxu0 %v244
    %303 = vmatpush2.msra.mxu0 %v243
    %304 = vmatprep.subr.mxu0 %v242
    %305 = vmatpush2.msra.mxu0 %v241
    %306 = vmatprep.subr.mxu0 %v240
    %307 = vmatpush2.msra.mxu0 %v239
    %308 = vmatprep.subr.mxu0 %v238
    %309 = vmatpush2.msra.mxu0 %v237
    %310 = vmatprep.subr.mxu0 %v236
    %311 = vmatpush2.msra.mxu0 %v235
    %312 = vmatprep.subr.mxu0 %v234
    %313 = vmatpush2.msra.mxu0 %v233
    %314 = vmatprep.subr.mxu0 %v232
    %315 = vmatpush2.msra.mxu0 %v231
    %316 = vmatprep.subr.mxu0 %v230
    %317 = vmatpush2.msra.mxu0 %v229
    %318 = vmatprep.subr.mxu0 %v228
    %319 = vmatpush2.msra.mxu0 %v227
    %320 = vmatprep.subr.mxu0 %v226
    %321 = vmatpush2.msra.mxu0 %v225
    %322 = vmatprep.subr.mxu0 %v224
    %323 = vmatpush2.msra.mxu0 %v223
    %324 = vmatprep.subr.mxu0 %v222
    %325 = vmatpush2.msra.mxu0 %v221
    %326 = vmatprep.mubr.f32.mxu0 %v259
    %327 = vmatmul.mubr.f32.gmra.mxu0 %v258
    %v328 = vpop.f32.mrf.mxu0
    %v329 = vadd.f32 0.0, %v328
    %v330 = vpop.f32.mrf.mxu0
    %v331 = vadd.f32 0.0, %v330
    %332 = vdwg.mxu0
    %v337 = vsel %vm257, %v94, %v92
    %v338 = vsel %vm257, %v95, %v93
    %341 = vmatprep.subr.mxu0 %v155
    %342 = vmatpush1.msra.mxu0 %v154
    %343 = vmatprep.subr.mxu0 %v153
    %344 = vmatpush1.msra.mxu0 %v152
    %345 = vmatprep.subr.mxu0 %v151
    %346 = vmatpush1.msra.mxu0 %v150
    %347 = vmatprep.subr.mxu0 %v149
    %348 = vmatpush1.msra.mxu0 %v148
    %349 = vmatprep.subr.mxu0 %v147
    %350 = vmatpush1.msra.mxu0 %v146
    %351 = vmatprep.subr.mxu0 %v145
    %352 = vmatpush1.msra.mxu0 %v144
    %353 = vmatprep.subr.mxu0 %v143
    %354 = vmatpush1.msra.mxu0 %v142
    %355 = vmatprep.subr.mxu0 %v141
    %356 = vmatpush1.msra.mxu0 %v140
    %357 = vmatprep.subr.mxu0 %v139
    %358 = vmatpush1.msra.mxu0 %v138
    %359 = vmatprep.subr.mxu0 %v137
    %360 = vmatpush1.msra.mxu0 %v136
    %361 = vmatprep.subr.mxu0 %v135
    %362 = vmatpush1.msra.mxu0 %v134
    %363 = vmatprep.subr.mxu0 %v133
    %364 = vmatpush1.msra.mxu0 %v132
    %365 = vmatprep.subr.mxu0 %v131
    %366 = vmatpush1.msra.mxu0 %v130
    %367 = vmatprep.subr.mxu0 %v129
    %368 = vmatpush1.msra.mxu0 %v128
    %369 = vmatprep.subr.mxu0 %v127
    %370 = vmatpush1.msra.mxu0 %v126
    %371 = vmatprep.subr.mxu0 %v125
    %372 = vmatpush1.msra.mxu0 %v124
    %373 = vmatprep.subr.mxu0 %v187
    %374 = vmatpush2.msra.mxu0 %v186
    %375 = vmatprep.subr.mxu0 %v185
    %376 = vmatpush2.msra.mxu0 %v184
    %377 = vmatprep.subr.mxu0 %v183
    %378 = vmatpush2.msra.mxu0 %v182
    %379 = vmatprep.subr.mxu0 %v181
    %380 = vmatpush2.msra.mxu0 %v180
    %381 = vmatprep.subr.mxu0 %v179
    %382 = vmatpush2.msra.mxu0 %v178
    %383 = vmatprep.subr.mxu0 %v177
    %384 = vmatpush2.msra.mxu0 %v176
    %385 = vmatprep.subr.mxu0 %v175
    %386 = vmatpush2.msra.mxu0 %v174
    %387 = vmatprep.subr.mxu0 %v173
    %388 = vmatpush2.msra.mxu0 %v172
    %389 = vmatprep.subr.mxu0 %v171
    %390 = vmatpush2.msra.mxu0 %v170
    %391 = vmatprep.subr.mxu0 %v169
    %392 = vmatpush2.msra.mxu0 %v168
    %393 = vmatprep.subr.mxu0 %v167
    %394 = vmatpush2.msra.mxu0 %v166
    %395 = vmatprep.subr.mxu0 %v165
    %396 = vmatpush2.msra.mxu0 %v164
    %397 = vmatprep.subr.mxu0 %v163
    %398 = vmatpush2.msra.mxu0 %v162
    %399 = vmatprep.subr.mxu0 %v161
    %400 = vmatpush2.msra.mxu0 %v160
    %401 = vmatprep.subr.mxu0 %v159
    %402 = vmatpush2.msra.mxu0 %v158
    %403 = vmatprep.subr.mxu0 %v157
    %404 = vmatpush2.msra.mxu0 %v156
    %405 = vmatprep.mubr.f32.mxu0 %v338
    %406 = vmatmul.mubr.f32.gmra.mxu0 %v337
    %v407 = vpop.f32.mrf.mxu0
    %v408 = vadd.f32 %v329, %v407
    %v409 = vpop.f32.mrf.mxu0
    %v410 = vadd.f32 %v331, %v409
    %411 = vdwg.mxu0
    %s412 = sld [smem:[#allocation2]]
    %s413 = sld [smem:[#allocation2 + $0x1]]
    %s414 = sld [smem:[#allocation2 + $0x2]]
    %vm415 = vcmask 1041408
    %v416 = vsel %vm415, %v408, 0.0
    %v417 = vsel %vm415, %v410, 0.0
    %v418 = vadd.f32 %v416, %v417
    %419 = vadd.xlane.f32.xlu0 %v418
    %v420 = vpop.xlane.xlu0 %419
    %v421 = vrot.slane %v420, 4
    %v422 = vadd.f32 %v420, %v421
    %v423 = vrot.slane %v422, 2
    %v424 = vadd.f32 %v422, %v423
    %v425 = vrot.slane %v424, 1
    %v426 = vadd.f32 %v424, %v425
    %s427 = vtos %v426
    %v428 = vrcp.pop 512.0
    %s429 = vtos %v428
    %s430 = smul.f32 %s427, %s429
    %v431 = vstv %s430
    %v432 = vsub.f32 %v408, %v431
    %v433 = vsub.f32 %v410, %v431
    %v434 = vmul.f32 %v432, %v432
    %v435 = vmul.f32 %v433, %v433
    %v436 = vsel %vm415, %v434, 0.0
    %v437 = vsel %vm415, %v435, 0.0
    %v438 = vadd.f32 %v436, %v437
    %439 = vadd.xlane.f32.xlu0 %v438
    %v440 = vpop.xlane.xlu0 %439
    %v441 = vrot.slane %v440, 4
    %v442 = vadd.f32 %v440, %v441
    %v443 = vrot.slane %v442, 2
    %v444 = vadd.f32 %v442, %v443
    %v445 = vrot.slane %v444, 1
    %v446 = vadd.f32 %v444, %v445
    %s447 = vtos %v446
    %v448 = vrcp.pop 512.0
    %s449 = vtos %v448
    %s450 = smul.f32 %s447, %s449
    %s451 = sadd.f32 %s450, %s414
    %v452 = vstv %s451
    %v453 = vrsqrt.pop %v452
    %s454 = vtos %v453
    %v455 = vstv %s454
    %v456 = vmul.f32 %v432, %v455
    %v457 = vmul.f32 %v433, %v455
    %v458 = vstv %s412
    %v459 = vmul.f32 %v456, %v458
    %v460 = vmul.f32 %v457, %v458
    %v461 = vstv %s413
    %v462 = vadd.f32 %v459, %v461
    %v463 = vadd.f32 %v460, %v461
    %v464 = vxor.u32 %v462, 2147483648
    %v465 = vxor.u32 %v463, 2147483648
    %v466 = vmul.f32 %v464, 1.442695
    %v467 = vpow.pop %v466
    %v468 = vmul.f32 %v465, 1.442695
    %v469 = vpow.pop %v468
    %v470 = vadd.f32 %v467, 1.0
    %v471 = vadd.f32 %v469, 1.0
    %v472 = vrcp.pop %v470
    %v473 = vmul.f32 1.0, %v472
    %v474 = vrcp.pop %v471
    %v475 = vmul.f32 1.0, %v474
    %v478 = vcombine.low %v473, %v475
    %v480 = vunpack.c.l.s4 1966171168
    %v481 = vunpack.c.0.s8 %v480
    %v482 = vlaneseq
    %v483 = vshrl.u32 %v482, 7
    %v484 = vsub.s32 %v481, %v483
    %v485 = vrot.slane %v478, %v484
    %v486 = vcombine.high %v485, %v485
    %v488 = vunpack.c.l.s4 1966171168
    %v489 = vunpack.c.0.s8 %v488
    %v490 = vlaneseq
    %v491 = vshrl.u32 %v490, 7
    %v492 = vsub.s32 %v489, %v491
    %v493 = vrot.slane %v485, %v492
    %v495 = vunpack.c.l.s4 1966171168
    %v496 = vunpack.c.0.s8 %v495
    %v497 = vlaneseq
    %v498 = vshrl.u32 %v497, 7
    %v499 = vsub.s32 %v496, %v498
    %v500 = vrot.slane %v486, %v499
    %v501 = vlaneseq
    %v502 = vshrl.u32 %v501, 7
    %v503 = vsub.s32 0, %v502
    %v504 = vrot.slane %v493, %v503
    %v505 = vlaneseq
    %v506 = vshrl.u32 %v505, 7
    %v507 = vsub.s32 1, %v506
    %v508 = vrot.slane %v493, %v507
    %v509 = vlaneseq
    %v510 = vshrl.u32 %v509, 7
    %v511 = vsub.s32 0, %v510
    %v512 = vrot.slane %v500, %v511
    %v513 = vlaneseq
    %v514 = vshrl.u32 %v513, 7
    %v515 = vsub.s32 1, %v514
    %v516 = vrot.slane %v500, %v515
    %v517 = vcombine.low %v504, %v508
    %v518 = vcombine.low %v512, %v516
    %v521 = vmul.f32 %v54, %v517
    %v522 = vmul.f32 %v55, %v518
    %523 = vst [vmem:[#allocation9] sm:$0xff] %v521
    %524 = vst [vmem:[#allocation9 + $0x8] sm:$0xff] %v522
    // Predicated region
    $region26: #{tpu_custom_call.1} parent=1 // pred_check
      _
    $region27: #{tpu_custom_call.1} parent=1 // pred_check_branch
      %526 = sbr.rel (0) target = $region29
    $region28: #{tpu_custom_call.1} parent=1 // pred_region
      %s528 = ssub.s32 256, 256
      %529 = vsyncadd [#allocation4], %s528
      %s530 = sshll.u32 [#allocation9], 4
      %s531 = int_to_ptr.vmem [resolvable:$true] %s530
      %536 = dma.vmem_to_hbm [thread:$0]  %s531, 256, %s3, [#allocation4], 128, 128, 8
    $region29: #{tpu_custom_call.1} parent=1 // pred_fallthru
      _
    // Predicated region
    $region30: #{tpu_custom_call.1} parent=1 // pred_check
      _
    $region31: #{tpu_custom_call.1} parent=1 // pred_check_branch
      %538 = sbr.rel (0) target = $region33
    $region32: #{tpu_custom_call.1} parent=1 // pred_region
      %539 = dma.done [#allocation4], 256
    $region33: #{tpu_custom_call.1} parent=1 // pred_fallthru
      _
    %540 = vsyncpa [#allocation3], 1
    %541 = vsyncpa [#allocation8], 1
    %542 = vsyncpa [#allocation4], 1
    %543 = vsyncpa [#allocation5], 1

</llo_original>
